<compile_context>
chip_gen: v5e
topology: v5e:2x2
jax: 0.10.0
libtpu: 0.0.40
codegen_flags: <defaults>
</compile_context>

<pallas_src>
import functools

import jax
import jax.numpy as jnp
from jax.experimental import pallas as pl
from jax.experimental.pallas import tpu as pltpu


# ---------------------------------------------------------------------------
# kernels
# ---------------------------------------------------------------------------
def _ni_kernel(img_ref, nz_ref, w_ref, out_ref):
    """out = img + w * nz.  w_ref already holds exactly this step's weights:
    a (cblk, 1) column (broadcasts along lanes) or a (cblk, sblk) folded slab."""
    out_ref[...] = (img_ref[...] + w_ref[...] * nz_ref[...]).astype(out_ref.dtype)


def _ni_kernel_sliced_w(cblk, chan_axis, img_ref, nz_ref, w_ref, out_ref):
    """Same math, but w_ref holds the whole (C, 1) weight resident in VMEM
    (constant index_map -> DMA'd once for the entire grid).  Slice this
    channel block's rows in-kernel instead of re-DMAing a tiny block/step."""
    c = pl.program_id(chan_axis)
    w = w_ref[pl.ds(pl.multiple_of(c * cblk, cblk), cblk), :]
    out_ref[...] = (img_ref[...] + w * nz_ref[...]).astype(out_ref.dtype)


# ---------------------------------------------------------------------------
# tiling helpers (all static / trace-time Python)
# ---------------------------------------------------------------------------
def _divisors(n):
    out = []
    i = 1
    while i * i <= n:
        if n % i == 0:
            out.append(i)
            if i != n // i:
                out.append(n // i)
        i += 1
    return sorted(out)


def _choose_tiles(C, L, itemsize, sub_q, target_bytes):
    """Pick (cblk, sblk): cblk | C (multiple of sub_q or == C), sblk | L
    (multiple of 128 or == L), maximizing block bytes <= target_bytes and
    preferring wide (lane-dense, HBM-contiguous) blocks."""
    if C * L * itemsize <= target_bytes:
        return C, L
    if L % 128 == 0:
        s_cands = sorted((128 * d for d in _divisors(L // 128)), reverse=True)
    else:
        s_cands = [L]
    c_cands = sorted({d for d in _divisors(C) if d % sub_q == 0} | {C}, reverse=True)
    best = None  # ((bytes, sblk), cblk, sblk)
    for s in s_cands:
        for c in c_cands:
            b = c * s * itemsize
            if b <= target_bytes:
                key = (b, s)
                if best is None or key > best[0]:
                    best = (key, c, s)
                break  # c_cands descending: first fit is the best for this s
    if best is None:  # pathological shapes: fall back to the smallest block
        return min(c_cands), min(s_cands)
    return best[1], best[2]


def _choose_channel_group(C, HW):
    """Smallest channel group g (g | C) so g*HW makes a lane-dense row."""
    divs = _divisors(C)
    for d in divs:
        if d * HW >= 512 and (d * HW) % 128 == 0:
            return d
    for d in divs:
        if d * HW >= 512:
            return d
    return C


# ---------------------------------------------------------------------------
# wrapper
# ---------------------------------------------------------------------------
def noise_injection(image, noise, weight, *, cblk=None, sblk=None,
                    donate_image=False):
    """NoiseInjection forward: image + weight * noise.

    image : (N, C, H, W)
    noise : (Nn, Cn, H, W) with Nn in {1, N}, Cn in {1, C}
    weight: (1, C, 1, 1)   -- the module's nn.Parameter
    """
    N, C, H, W = image.shape
    HW = H * W
    nz_bn, nz_c = noise.shape[0], noise.shape[1]
    assert noise.shape[2:] == (H, W)
    assert nz_bn in (1, N) and nz_c in (1, C)
    assert weight.shape == (1, C, 1, 1)

    itemsize = jnp.dtype(image.dtype).itemsize
    sub_q = max(8, 32 // itemsize)       # sublane quantum: f32->8, bf16->16, int8->32
    target_bytes = 2 * 1024 * 1024       # image-block size on the DMA plateau
    # (kept at 2 MiB so resident VMEM stays ~12 MiB even for per-channel noise;
    #  a 4 MiB v6e-only bump would only shave a few % of per-step overhead.)

    fold = (HW % 128 != 0) and (HW < 512)
    if fold:
        # Fold g channels onto the lane axis -> lane-dense loads/stores for
        # small-spatial layers (4x4 / 8x8).  Weight is expanded to a small
        # (C//g, g*HW) slab; per-batch noise is tiled g times along lanes
        # (both tiny vs. the image stream).
        g = _choose_channel_group(C, HW)
        Cb, L = C // g, g * HW
        img3 = image.reshape(N, Cb, L)
        if nz_c == 1:
            nz3 = jnp.tile(noise.reshape(nz_bn, 1, HW), (1, 1, g))
            nzc3 = 1
        else:
            nz3 = noise.reshape(nz_bn, Cb, L)
            nzc3 = Cb
        w2 = jnp.broadcast_to(weight.reshape(Cb, g, 1), (Cb, g, HW)).reshape(Cb, L)
        w_is_col = False
    else:
        Cb, L = C, HW
        img3 = image.reshape(N, Cb, L)
        nz3 = noise.reshape(nz_bn, nz_c, L)
        nzc3 = nz_c
        w2 = weight.reshape(Cb, 1)
        w_is_col = True

    # ---- tile sizes (heuristic, with validated user overrides) ----
    auto_cblk, auto_sblk = _choose_tiles(Cb, L, itemsize, sub_q, target_bytes)
    if cblk is None:
        cblk = auto_cblk
    if sblk is None:
        sblk = auto_sblk
    assert Cb % cblk == 0 and L % sblk == 0, "block sizes must divide (C, H*W)"
    assert sblk % 128 == 0 or sblk == L, "sblk must be a multiple of 128 or full"
    assert cblk % 8 == 0 or cblk == Cb, "cblk must be a multiple of 8 or full"
    n_c, n_s = Cb // cblk, L // sblk

    # ---- grid: channel axis innermost (per-batch noise stays resident);
    #      batch axis dropped for N == 1 so the leading parallel axis can be
    #      split across v7x's two TensorCores. ----
    if N > 1:
        grid = (N, n_s, n_c)
        chan_axis = 2
        img_map = lambda n, s, c: (n, c, s)
        nz_map = lambda n, s, c: (n if nz_bn == N else 0, c if nzc3 > 1 else 0, s)
        w_map_const = lambda n, s, c: (0, 0)
        w_map_fold = lambda n, s, c: (c, s)
    else:
        grid = (n_s, n_c)
        chan_axis = 1
        img_map = lambda s, c: (0, c, s)
        nz_map = lambda s, c: (0, c if nzc3 > 1 else 0, s)
        w_map_const = lambda s, c: (0, 0)
        w_map_fold = lambda s, c: (c, s)

    img_spec = pl.BlockSpec((1, cblk, sblk), img_map)
    nz_block = (1, 1, sblk) if nzc3 == 1 else (1, cblk, sblk)
    nz_spec = pl.BlockSpec(nz_block, nz_map)
    out_spec = pl.BlockSpec((1, cblk, sblk), img_map)

    if w_is_col:
        # Whole (C, 1) weight resident in VMEM (constant index map -> one DMA).
        w_spec = pl.BlockSpec((Cb, 1), w_map_const)
        if n_c == 1:
            kernel = _ni_kernel
        else:
            kernel = functools.partial(_ni_kernel_sliced_w, cblk, chan_axis)
    else:
        w_spec = pl.BlockSpec((cblk, sblk), w_map_fold)
        kernel = _ni_kernel

    extra = {}
    if donate_image:
        # Caller guarantees the pre-injection image is dead: reuse its buffer.
        extra["input_output_aliases"] = {0: 0}

    out3 = pl.pallas_call(
        kernel,
        out_shape=jax.ShapeDtypeStruct((N, Cb, L), image.dtype),
        grid=grid,
        in_specs=[img_spec, nz_spec, w_spec],
        out_specs=out_spec,
        compiler_params=pltpu.CompilerParams(
            dimension_semantics=tuple("parallel" for _ in grid),
            vmem_limit_bytes=32 * 1024 * 1024),
        **extra,
    )(img3, nz3, w2)

    return out3.reshape(N, C, H, W)


# ---------------------------------------------------------------------------
# self-test
# ---------------------------------------------------------------------------
if __name__ == "__main__":
    key = jax.random.PRNGKey(0)
    ks = jax.random.split(key, 8)

    def check(image, noise, weight, atol=1e-6, rtol=1e-6, **kw):
        out = noise_injection(image, noise, weight, **kw)
        jax.block_until_ready(out)
        ref = (image + weight * noise).astype(image.dtype)
        assert out.shape == image.shape and out.dtype == image.dtype
        assert jnp.allclose(out.astype(jnp.float32), ref.astype(jnp.float32),
                            atol=atol, rtol=rtol), "mismatch vs reference"
        return out

    # 1) module-faithful small case: per-batch noise, zero-initialized gate
    N, C, H, W = 2, 4, 16, 16
    image = jax.random.normal(ks[0], (N, C, H, W), jnp.float32)
    noise = jax.random.normal(ks[1], (N, 1, H, W), jnp.float32)
    w0 = jnp.zeros((1, C, 1, 1), jnp.float32)        # nn.Parameter(torch.zeros(...))
    check(image, noise, w0)

    # 2) trained (non-zero) gate
    w1 = jax.random.normal(ks[2], (1, C, 1, 1), jnp.float32) * 0.5
    check(image, noise, w1)

    # 3) full per-channel noise
    noise_full = jax.random.normal(ks[3], (N, C, H, W), jnp.float32)
    check(image, noise_full, w1)

    # 4) blocked channel axis -> resident-weight + in-kernel slice path
    C2 = 16
    image2 = jax.random.normal(ks[4], (N, C2, H, W), jnp.float32)
    w2 = jax.random.normal(ks[5], (1, C2, 1, 1), jnp.float32) * 0.5
    check(image2, noise, w2, cblk=8)

    # 5) small-spatial (4x4) layer -> channel-fold path, with batch-broadcast noise
    image3 = jax.random.normal(ks[6], (N, 8, 4, 4), jnp.float32)
    noise3 = jax.random.normal(ks[7], (1, 1, 4, 4), jnp.float32)
    w3 = jax.random.normal(ks[2], (1, 8, 1, 1), jnp.float32) * 0.5
    check(image3, noise3, w3)

    # 6) N == 1 (2-D grid so the leading parallel axis can still split on v7x)
    check(image[:1], noise[:1], w1)

    # 7) bf16 activations on the fold path (dtype-aware sublane floor)
    image4 = jax.random.normal(ks[4], (N, 32, 8, 8), jnp.bfloat16)
    noise4 = jax.random.normal(ks[5], (N, 1, 8, 8), jnp.bfloat16)
    w4 = jax.random.normal(ks[6], (1, 32, 1, 1), jnp.float32) * 0.5
    check(image4, noise4, w4, atol=2e-2, rtol=2e-2)

    print("KERNEL_OK")
</pallas_src>

<mosaic_0001>
module attributes {stable_mosaic.version = 11 : i64} {
  func.func @_ni_kernel(%arg0: i32, %arg1: i32, %arg2: i32, %arg3: memref<1x4x256xf32, #tpu.memory_space<vmem>>, %arg4: memref<1x1x256xf32, #tpu.memory_space<vmem>>, %arg5: memref<4x1xf32, #tpu.memory_space<vmem>>, %arg6: memref<1x4x256xf32, #tpu.memory_space<vmem>>) attributes {dimension_semantics = [#tpu.dimension_semantics<parallel>, #tpu.dimension_semantics<parallel>, #tpu.dimension_semantics<parallel>], iteration_bounds = array<i64: 2, 1, 1>, scalar_prefetch = 0 : i64, scratch_operands = 0 : i64, tpu.core_type = #tpu.core_type<tc>, window_params = [{transform_indices = @transform_0, window_bounds = array<i64: 1, 4, 256>}, {transform_indices = @transform_1, window_bounds = array<i64: 1, 1, 256>}, {pipeline_mode = #tpu.pipeline_mode<synchronous>, transform_indices = @transform_2, window_bounds = array<i64: 4, 1>}, {transform_indices = @transform_3, window_bounds = array<i64: 1, 4, 256>}]} {
    %c0 = arith.constant 0 : index
    %c0_0 = arith.constant 0 : index
    %c0_1 = arith.constant 0 : index
    %0 = vector.load %arg3[%c0, %c0_0, %c0_1] : memref<1x4x256xf32, #tpu.memory_space<vmem>>, vector<1x4x256xf32>
    %c0_2 = arith.constant 0 : index
    %c0_3 = arith.constant 0 : index
    %1 = vector.load %arg5[%c0_2, %c0_3] : memref<4x1xf32, #tpu.memory_space<vmem>>, vector<4x1xf32>
    %c0_4 = arith.constant 0 : index
    %c0_5 = arith.constant 0 : index
    %c0_6 = arith.constant 0 : index
    %2 = vector.load %arg4[%c0_4, %c0_5, %c0_6] : memref<1x1x256xf32, #tpu.memory_space<vmem>>, vector<1x1x256xf32>
    %3 = vector.shape_cast %1 : vector<4x1xf32> to vector<1x4x1xf32>
    %4 = vector.broadcast %3 : vector<1x4x1xf32> to vector<1x4x256xf32>
    %5 = vector.broadcast %2 : vector<1x1x256xf32> to vector<1x4x256xf32>
    %6 = arith.mulf %4, %5 : vector<1x4x256xf32>
    %7 = arith.addf %0, %6 : vector<1x4x256xf32>
    %c0_7 = arith.constant 0 : index
    %c0_8 = arith.constant 0 : index
    %c0_9 = arith.constant 0 : index
    %8 = vector.load %arg6[%c0_7, %c0_8, %c0_9] : memref<1x4x256xf32, #tpu.memory_space<vmem>>, vector<1x4x256xf32>
    tpu.vector_store %arg6[%c0_7, %c0_8, %c0_9], %7 {strides = array<i32>} : memref<1x4x256xf32, #tpu.memory_space<vmem>>, vector<1x4x256xf32>,
    return
  }
  func.func @transform_0(%arg0: i32, %arg1: i32, %arg2: i32) -> (i32, i32, i32) {
    %c0_i32 = arith.constant 0 : i32
    return %arg0, %arg2, %arg1 : i32, i32, i32
  }
  func.func @transform_1(%arg0: i32, %arg1: i32, %arg2: i32) -> (i32, i32, i32) {
    %c0_i32 = arith.constant 0 : i32
    %c0_i32_0 = arith.constant 0 : i32
    return %arg0, %c0_i32, %arg1 : i32, i32, i32
  }
  func.func @transform_2(%arg0: i32, %arg1: i32, %arg2: i32) -> (i32, i32) {
    %c0_i32 = arith.constant 0 : i32
    %c0_i32_0 = arith.constant 0 : i32
    %c0_i32_1 = arith.constant 0 : i32
    return %c0_i32, %c0_i32_0 : i32, i32
  }
  func.func @transform_3(%arg0: i32, %arg1: i32, %arg2: i32) -> (i32, i32, i32) {
    %c0_i32 = arith.constant 0 : i32
    return %arg0, %arg2, %arg1 : i32, i32, i32
  }
}

</mosaic_0001>

<llo_original>
// kernel: tpu_custom_call.1
$region0: #{tpu_custom_call.1}
  #allocation0 [shape = 'u32[]', space=smem, size = 0x4, offset = 0x4, fixed_abs, tag = 'smem constant byte address 0x4 - core index']
  #allocation1 [shape = 'u32[72,128]{1,0:T(1,128)}', space=vmem, size = 0x9000, scoped, tag = 'internal scratch']
  %s0 = inlined_call_operand.hbm [shape: f32[2,4,256], index: 0, kind: input, shape index: {}]
  %s1 = inlined_call_operand.vmem [shape: f32[2,1,256], index: 1, kind: input, shape index: {}]
  %s2 = inlined_call_operand.vmem [shape: f32[4,1], index: 2, kind: input, shape index: {}]
  %s3 = inlined_call_operand.hbm [shape: f32[2,4,256], index: 3, kind: output, shape index: {}]
  %s4 = sld [smem:[#allocation0]]
  $region49: #{tpu_custom_call.1} parent=0
    _
  %s6 = ssub.s32 1, %s4
  %s7 = scalar_select 0, %s6, %s4
  $region1: #{tpu_custom_call.1} parent=0
    #allocation2 [shape = 'u8[8192]{0}', space=vmem, size = 0x2000, scoped, tag = 'input window, operand 0']
    #allocation3 [shape = 's32[2]{0}', space=sflag, size = 0x8, scoped, tag = 'scoped memory for tpu_custom_call.1']
    #allocation4 [shape = 's32[2]{0}', space=sflag, size = 0x8, scoped, tag = 'scoped memory for tpu_custom_call.1']
    #allocation5 [shape = 'u8[8192]{0}', space=vmem, size = 0x2000, scoped, tag = 'output window, operand 0']
    %8 = vsyncpa [#allocation3], 0
    %s9 = scalar_lea.sflag [#allocation3], 1
    %10 = vsyncpa %s9, 0
    %11 = vsyncpa [#allocation4], 0
    %s12 = scalar_lea.sflag [#allocation4], 1
    %13 = vsyncpa %s12, 0
    loop: start=0, step=1, limit=4
    $region2: #{tpu_custom_call.1} parent=1 // loop_pre_header
      _
    $region3: #{tpu_custom_call.1} parent=1 // loop_header
      %s15 = sphi 0, %s19
      %p16 = scmp.ge.s32.totalorder %s15, 4
      %s22 = sphi 0, %s41
      %s23 = sphi 0, %s37
      %s24 = sphi 0, %s33
      %s25 = sphi 0, %s22
      %s26 = sphi 0, %s23
      %s27 = sphi 0, %s24
      %s28 = sphi 0, %s25
      %s29 = sphi 0, %s26
      %s30 = sphi 0, %s27
      %s48 = sphi 0, %s50
      %s51 = sphi 0, %s48
      %s52 = sphi 0, %s51
      %s68 = sphi 0, %s52
      %s76 = sphi 0, %s78
      %s79 = sphi 0, %s76
      %s80 = sphi 0, %s79
      %s96 = sphi 0, %s80
      %s100 = sphi 0, %s100
      %s102 = sphi 0, %s100
      %s103 = sphi 0, %s102
      %s117 = sphi 0, %s103
      %s127 = sphi 0, %s129
      %s130 = sphi 0, %s127
      %s131 = sphi 0, %s130
      %s147 = sphi 0, %s131
    $region4: #{tpu_custom_call.1} parent=1 // loop_header_branch
      %18 = sbr.rel (%p16) target = $region8
    $region5: #{tpu_custom_call.1} parent=1 // loop_body
      %s20 = ssub.s32 %s15, 1
      %s21 = ssub.s32 %s15, 2
      %s31 = sadd.s32 1, %s24
      %p32 = scmp.ge.s32.totalorder %s31, 1
      %s33 = scalar_select %p32, 0, %s31
      %s34 = sadd.s32 1, %s23
      %s35 = scalar_select %p32, %s34, %s23
      %p36 = scmp.ge.s32.totalorder %s35, 1
      %s37 = scalar_select %p36, 0, %s35
      %s38 = sadd.s32 1, %s22
      %s39 = scalar_select %p36, %s38, %s22
      %p40 = scmp.ge.s32.totalorder %s39, 2
      %s41 = scalar_select %p40, 0, %s39
      %s42 = ssub.s32 %s22, %s41
      %s43 = ssub.s32 %s24, %s33
      %s44 = sor.u32 %s42, %s43
      %s45 = ssub.s32 %s23, %s37
      %s46 = sor.u32 %s44, %s45
      %p47 = scmp.eq.s32.totalorder %s46, 0
      %s49 = sadd.s32 %s48, 1
      %s50 = scalar_select %p47, %s48, %s49
      %p53 = pneg %p47
      %p54 = scmp.eq.s32.totalorder %s15, 1
      %p55 = por %p53, %p54
      %p56 = scmp.ne.s32.totalorder %s48, %s51
      %p57 = scmp.eq.s32.totalorder %s15, 0
      %p58 = por %p56, %p57
      %p59 = scmp.ne.s32.totalorder %s48, %s51
      %p60 = scmp.eq.s32.totalorder %s20, 1
      %p61 = por %p59, %p60
      %p62 = scmp.ne.s32.totalorder %s51, %s52
      %p63 = scmp.eq.s32.totalorder %s20, 0
      %p64 = por %p62, %p63
      %p65 = scmp.ne.s32.totalorder %s51, %s52
      %p66 = scmp.eq.s32.totalorder %s21, 1
      %p67 = por %p65, %p66
      %p69 = scmp.ne.s32.totalorder %s52, %s68
      %p70 = scmp.eq.s32.totalorder %s21, 0
      %p71 = por %p69, %p70
      %s72 = ssub.s32 %s22, %s41
      %s73 = ssub.s32 %s23, %s37
      %s74 = sor.u32 %s72, %s73
      %p75 = scmp.eq.s32.totalorder %s74, 0
      %s77 = sadd.s32 %s76, 1
      %s78 = scalar_select %p75, %s76, %s77
      %p81 = pneg %p75
      %p82 = scmp.eq.s32.totalorder %s15, 1
      %p83 = por %p81, %p82
      %p84 = scmp.ne.s32.totalorder %s76, %s79
      %p85 = scmp.eq.s32.totalorder %s15, 0
      %p86 = por %p84, %p85
      %p87 = scmp.ne.s32.totalorder %s76, %s79
      %p88 = scmp.eq.s32.totalorder %s20, 1
      %p89 = por %p87, %p88
      %p90 = scmp.ne.s32.totalorder %s79, %s80
      %p91 = scmp.eq.s32.totalorder %s20, 0
      %p92 = por %p90, %p91
      %p93 = scmp.ne.s32.totalorder %s79, %s80
      %p94 = scmp.eq.s32.totalorder %s21, 1
      %p95 = por %p93, %p94
      %p97 = scmp.ne.s32.totalorder %s80, %s96
      %p98 = scmp.eq.s32.totalorder %s21, 0
      %p99 = por %p97, %p98
      %s101 = sadd.s32 %s100, 1
      %p104 = scmp.eq.s32.totalorder %s15, 1
      %p105 = scmp.ne.s32.totalorder %s100, %s102
      %p106 = scmp.eq.s32.totalorder %s15, 0
      %p107 = por %p105, %p106
      %p108 = scmp.ne.s32.totalorder %s100, %s102
      %p109 = scmp.eq.s32.totalorder %s20, 1
      %p110 = por %p108, %p109
      %p111 = scmp.ne.s32.totalorder %s102, %s103
      %p112 = scmp.eq.s32.totalorder %s20, 0
      %p113 = por %p111, %p112
      %p114 = scmp.ne.s32.totalorder %s102, %s103
      %p115 = scmp.eq.s32.totalorder %s21, 1
      %p116 = por %p114, %p115
      %p118 = scmp.ne.s32.totalorder %s103, %s117
      %p119 = scmp.eq.s32.totalorder %s21, 0
      %p120 = por %p118, %p119
      %s121 = ssub.s32 %s22, %s41
      %s122 = ssub.s32 %s24, %s33
      %s123 = sor.u32 %s121, %s122
      %s124 = ssub.s32 %s23, %s37
      %s125 = sor.u32 %s123, %s124
      %p126 = scmp.eq.s32.totalorder %s125, 0
      %s128 = sadd.s32 %s127, 1
      %s129 = scalar_select %p126, %s127, %s128
      %p132 = pneg %p126
      %p133 = scmp.eq.s32.totalorder %s15, 1
      %p134 = por %p132, %p133
      %p135 = scmp.ne.s32.totalorder %s127, %s130
      %p136 = scmp.eq.s32.totalorder %s15, 0
      %p137 = por %p135, %p136
      %p138 = scmp.ne.s32.totalorder %s127, %s130
      %p139 = scmp.eq.s32.totalorder %s20, 1
      %p140 = por %p138, %p139
      %p141 = scmp.ne.s32.totalorder %s130, %s131
      %p142 = scmp.eq.s32.totalorder %s20, 0
      %p143 = por %p141, %p142
      %p144 = scmp.ne.s32.totalorder %s130, %s131
      %p145 = scmp.eq.s32.totalorder %s21, 1
      %p146 = por %p144, %p145
      %p148 = scmp.ne.s32.totalorder %s131, %s147
      %p149 = scmp.eq.s32.totalorder %s21, 0
      %p150 = por %p148, %p149
      %p151 = scmp.le.s32.totalorder 1, %s15
      %p152 = scmp.lt.s32.totalorder %s15, 3
      %p153 = pnand %p151, %p152
      %p154 = pneg %p153
      // Predicated region
      $region9: #{tpu_custom_call.1} parent=5 // pred_check
        _
      $region10: #{tpu_custom_call.1} parent=5 // pred_check_branch
        %156 = sbr.rel (%p153) target = $region12
      $region11: #{tpu_custom_call.1} parent=5 // pred_region
        %s157 = ssub.s32 %s15, 1
        // Predicated region
        $region13: #{tpu_custom_call.1} parent=11 // pred_check
          %p158 = pneg %p113
        $region14: #{tpu_custom_call.1} parent=11 // pred_check_branch
          %160 = sbr.rel (%p158) target = $region16
        $region15: #{tpu_custom_call.1} parent=11 // pred_region
          _
        $region16: #{tpu_custom_call.1} parent=11 // pred_fallthru
          _
      $region12: #{tpu_custom_call.1} parent=5 // pred_fallthru
        _
      %p161 = scmp.lt.s32.totalorder %s15, 2
      // Predicated region
      $region17: #{tpu_custom_call.1} parent=5 // pred_check
        %p162 = pneg %p161
      $region18: #{tpu_custom_call.1} parent=5 // pred_check_branch
        %164 = sbr.rel (%p162) target = $region20
      $region19: #{tpu_custom_call.1} parent=5 // pred_region
        // Predicated region
        $region21: #{tpu_custom_call.1} parent=19 // pred_check
          %p165 = pneg %p58
        $region22: #{tpu_custom_call.1} parent=19 // pred_check_branch
          %167 = sbr.rel (%p165) target = $region24
        $region23: #{tpu_custom_call.1} parent=19 // pred_region
          %s168 = sand.u32 %s48, 1
          %s169 = scalar_lea.sflag [#allocation3], %s168
          %s170 = sand.u32 %s48, 1
          %s171 = smul.addr %s170, 8
          %s172 = scalar_lea.vmem [#allocation2], %s171
          %s173 = smul.u32 2, %s23
          %175 = vsyncadd %s169, 0
          %s176 = smul.addr %s24, 2
          %s177 = sadd.s32 %s173, %s176
          %s178 = smul.addr %s22, 2
          %s179 = sadd.s32 %s177, %s178
          %s180 = smul.addr %s179, 4
          %s181 = scalar_lea.hbm %s0, %s180
          %s183 = sshll.u32 %s181, 4
          %s184 = int_to_ptr.hbm [resolvable:$true] %s183
          %s185 = sshll.u32 %s172, 4
          %s186 = int_to_ptr.vmem [resolvable:$true] %s185
          %188 = dma.hbm_to_vmem [thread:$0]  %s184, 128, %s186, %s169
        $region24: #{tpu_custom_call.1} parent=19 // pred_fallthru
          _
        // Predicated region
        $region25: #{tpu_custom_call.1} parent=19 // pred_check
          %p189 = pneg %p86
        $region26: #{tpu_custom_call.1} parent=19 // pred_check_branch
          %191 = sbr.rel (%p189) target = $region28
        $region27: #{tpu_custom_call.1} parent=19 // pred_region
          %s192 = smul.u32 2, %s23
          %p193 = scmp.lt.s32.totalorder %s22, 1
          %s194 = scalar_select %p193, %s22, 1
          %p195 = scmp.lt.s32.totalorder %s192, 1
          %s196 = scalar_select %p195, %s192, 1
          %s197 = smul.addr %s194, 2
          %s198 = sadd.s32 %s196, %s197
          %s199 = scalar_lea.vmem %s1, %s198
          %s200 = smul.u32 2, %s23
        $region28: #{tpu_custom_call.1} parent=19 // pred_fallthru
          _
      $region20: #{tpu_custom_call.1} parent=5 // pred_fallthru
        _
      %p201 = scmp.le.s32.totalorder 1, %s15
      %p202 = scmp.lt.s32.totalorder %s15, 3
      %p203 = pnand %p201, %p202
      %p204 = pneg %p203
      // Predicated region
      $region29: #{tpu_custom_call.1} parent=5 // pred_check
        _
      $region30: #{tpu_custom_call.1} parent=5 // pred_check_branch
        %206 = sbr.rel (%p203) target = $region32
      $region31: #{tpu_custom_call.1} parent=5 // pred_region
        %s207 = ssub.s32 %s15, 1
        %s208 = sand.u32 %s51, 1
        %s209 = scalar_lea.sflag [#allocation3], %s208
        %s210 = sand.u32 %s51, 1
        %s211 = smul.addr %s210, 8
        %s212 = scalar_lea.vmem [#allocation2], %s211
        // Predicated region
        $region33: #{tpu_custom_call.1} parent=31 // pred_check
          %p213 = pneg %p64
        $region34: #{tpu_custom_call.1} parent=31 // pred_check_branch
          %215 = sbr.rel (%p213) target = $region36
        $region35: #{tpu_custom_call.1} parent=31 // pred_region
          %217 = dma.done %s209, 128
        $region36: #{tpu_custom_call.1} parent=31 // pred_fallthru
          _
        %s218 = sand.u32 %s51, 1
        %s219 = scalar_lea.sflag [#allocation3], %s218
        %s220 = sand.u32 %s51, 1
        %s221 = smul.addr %s220, 8
        %s222 = scalar_lea.vmem [#allocation2], %s221
        %p223 = pneg %p64
        %p224 = pneg %p61
        %s225 = smul.u32 2, %s26
        %p226 = scmp.lt.s32.totalorder %s25, 1
        %s227 = scalar_select %p226, %s25, 1
        %p228 = scmp.lt.s32.totalorder %s225, 1
        %s229 = scalar_select %p228, %s225, 1
        %s230 = smul.addr %s227, 2
        %s231 = sadd.s32 %s229, %s230
        %s232 = scalar_lea.vmem %s1, %s231
        %p233 = pneg %p92
        %p234 = pneg %p89
        %p235 = pneg %p113
        %p236 = pneg %p110
        %p237 = pneg %p143
        %p238 = pneg %p140
        %s239 = sand.u32 %s130, 1
        %s240 = scalar_lea.sflag [#allocation4], %s239
        %s241 = sand.u32 %s130, 1
        %s242 = smul.addr %s241, 8
        %s243 = scalar_lea.vmem [#allocation5], %s242
        %s244 = smul.u32 2, %s26
        %s245 = smul.u32 2, %s26
        %p246 = scmp.lt.s32.totalorder %s25, 1
        %s247 = scalar_select %p246, %s25, 1
        %p248 = scmp.lt.s32.totalorder %s245, 1
        %s249 = scalar_select %p248, %s245, 1
        %s250 = smul.addr %s247, 2
        %s251 = sadd.s32 %s249, %s250
        %s252 = scalar_lea.vmem %s1, %s251
        %s253 = smul.u32 2, %s26
        %s254 = smul.u32 2, %s26
        %v255 = vld [vmem:[%s212] sm:$0xff]
        %v256 = vld [vmem:[%s2] sm:$0xf]
        %v257 = vld [vmem:[%s252] sm:$0x3]
        %259 = vset.pattern.permute.xlu0 0
        %260 = vperm.xlu0 %259, %v256
        %v261 = vpop.permute.xlu0 %260
        %v264 = vperm.slane %v257, 0
        %v265 = vperm.slane %v257, 1
        %v268 = vmul.f32 %v261, %v264
        %v269 = vmul.f32 %v261, %v265
        %v272 = vrot.slane %v269, 4
        %vm273 = vcmask 1043456
        %v274 = vsel %vm273, %v268, %v272
        %v276 = vadd.f32 %v255, %v274
        %277 = vst [vmem:[%s243] sm:$0xff] %v276
        %s278 = sand.u32 %s130, 1
        %s279 = scalar_lea.sflag [#allocation4], %s278
        %s280 = sand.u32 %s130, 1
        %s281 = smul.addr %s280, 8
        %s282 = scalar_lea.vmem [#allocation5], %s281
        // Predicated region
        $region37: #{tpu_custom_call.1} parent=31 // pred_check
          %p283 = pneg %p140
        $region38: #{tpu_custom_call.1} parent=31 // pred_check_branch
          %285 = sbr.rel (%p283) target = $region40
        $region39: #{tpu_custom_call.1} parent=31 // pred_region
          %s286 = smul.u32 2, %s26
          %288 = vsyncadd %s279, 0
          %s289 = smul.addr %s27, 2
          %s290 = sadd.s32 %s286, %s289
          %s291 = smul.addr %s25, 2
          %s292 = sadd.s32 %s290, %s291
          %s293 = smul.addr %s292, 4
          %s294 = scalar_lea.hbm %s3, %s293
          %s296 = sshll.u32 %s282, 4
          %s297 = int_to_ptr.vmem [resolvable:$true] %s296
          %s298 = sshll.u32 %s294, 4
          %s299 = int_to_ptr.hbm [resolvable:$true] %s298
          %301 = dma.vmem_to_hbm [thread:$0]  %s297, 128, %s299, %s279
        $region40: #{tpu_custom_call.1} parent=31 // pred_fallthru
          _
      $region32: #{tpu_custom_call.1} parent=5 // pred_fallthru
        _
      %p302 = scmp.le.s32.totalorder 2, %s15
      // Predicated region
      $region41: #{tpu_custom_call.1} parent=5 // pred_check
        %p303 = pneg %p302
      $region42: #{tpu_custom_call.1} parent=5 // pred_check_branch
        %305 = sbr.rel (%p303) target = $region44
      $region43: #{tpu_custom_call.1} parent=5 // pred_region
        %s306 = ssub.s32 %s15, 2
        // Predicated region
        $region45: #{tpu_custom_call.1} parent=43 // pred_check
          %p307 = pneg %p146
        $region46: #{tpu_custom_call.1} parent=43 // pred_check_branch
          %309 = sbr.rel (%p307) target = $region48
        $region47: #{tpu_custom_call.1} parent=43 // pred_region
          %s310 = sand.u32 %s131, 1
          %s311 = scalar_lea.sflag [#allocation4], %s310
          %s312 = sand.u32 %s131, 1
          %s313 = smul.addr %s312, 8
          %s314 = scalar_lea.vmem [#allocation5], %s313
          %316 = dma.done %s311, 128
        $region48: #{tpu_custom_call.1} parent=43 // pred_fallthru
          _
      $region44: #{tpu_custom_call.1} parent=5 // pred_fallthru
        _
    $region6: #{tpu_custom_call.1} parent=1 // loop_footer
      %s19 = sadd.s32 1, %s15
    $region7: #{tpu_custom_call.1} parent=1 // loop_footer_branch
      %14 = sbr.rel target = $region3
    $region8: #{tpu_custom_call.1} parent=1 // loop_exit
      _
    %317 = vsyncpa [#allocation3], 1
    %s318 = scalar_lea.sflag [#allocation3], 1
    %319 = vsyncpa %s318, 1
    %320 = vsyncpa [#allocation4], 1
    %s321 = scalar_lea.sflag [#allocation4], 1
    %322 = vsyncpa %s321, 1

</llo_original>
